<compile_context>
chip_gen: v7x
topology: tpu7x:2x2x1
jax: 0.10.0
libtpu: 0.0.40
codegen_flags: <defaults>
</compile_context>

<pallas_src>
import functools

import jax
import jax.numpy as jnp
from jax.experimental import pallas as pl
from jax.experimental.pallas import tpu as pltpu


def _dense_graph_conv_kernel(adj_ref, x_ref, w_ref, b_ref, o_ref,
                             *, aggregate: str, d_in: int, d_out: int):
    """One grid step == (bt batch elements) x (tn adjacency rows).

    adj_ref: (bt, tn, N)   int8 / bf16 / f32  VMEM (adjacency row tile)
    x_ref:   (bt, N, Din)  f32                VMEM (all nodes: contraction stays whole)
    w_ref:   (2*Din, Dp)   f32  VMEM, rows [0:Din]=W1^T, [Din:2*Din]=W2^T (lane-padded)
    b_ref:   (1, Dp)       f32  VMEM (lane-padded bias)
    o_ref:   (bt, tn, Dp)  f32  VMEM
    """
    bt, tn, _ = adj_ref.shape
    n_nodes = x_ref.shape[1]
    dp = w_ref.shape[1]

    # Adjacency goes straight to the bf16 MXU path (no f32 materialization of
    # the largest tile).  0/1 adjacency is exact in int8/bf16.  If the caller
    # kept the adjacency in f32 (weighted graph), stay on the exact f32 path.
    adj = adj_ref[...]
    x_f32 = x_ref[...]
    if adj.dtype == jnp.float32:
        x_mm = x_f32
    else:
        adj = adj.astype(jnp.bfloat16)
        x_mm = x_f32.astype(jnp.bfloat16)

    # Neighborhood aggregation A @ X (batched MXU matmul, f32 accumulation).
    ax = jnp.einsum('brm,bmd->brd', adj, x_mm,
                    preferred_element_type=jnp.float32)          # (bt, tn, Din)

    # Rows of X matching this output row tile (operand of linear2).
    if tn == n_nodes:
        x_rows = x_f32
    else:
        row0 = pl.multiple_of(pl.program_id(1) * tn, tn)
        x_rows = x_ref[:, pl.ds(row0, tn), :]                    # (bt, tn, Din)

    # Fold batch+rows so each weight matmul is one larger MXU pass against the
    # shared lane-dense stacked weight tile.
    ax2 = ax.reshape(bt * tn, d_in)
    x2 = x_rows.reshape(bt * tn, d_in)

    if aggregate == 'sum':
        # Fused:  [A@X | X] @ [W1^T ; W2^T]   (single matmul, K = 2*Din).
        xcat = jnp.concatenate([ax2, x2], axis=-1)               # (bt*tn, 2*Din)
        out = jnp.dot(xcat, w_ref[...], preferred_element_type=jnp.float32)
    else:
        w = w_ref[...]
        h1 = jnp.dot(ax2, w[:d_in, :], preferred_element_type=jnp.float32)
        h2 = jnp.dot(x2, w[d_in:, :], preferred_element_type=jnp.float32)
        if aggregate == 'max':
            # Mask padded lanes to -inf: keeps the reduce lane-dense (no
            # non-aligned slice copy); padding never biases the max.
            col = jax.lax.broadcasted_iota(jnp.int32, h1.shape, 1)
            h1 = jnp.max(jnp.where(col < d_out, h1, -jnp.inf),
                         axis=-1, keepdims=True)                 # (bt*tn, 1)
        else:  # 'mean'
            # Padded h1 columns are exactly zero, so the feature sum is unchanged.
            s = jnp.sum(h1, axis=-1, keepdims=True)
            r = pl.reciprocal(s, approx=True)                    # EUP slot
            r = r * (2.0 - s * r)                                # one Newton step -> ~f32 exact
            h1 = h1 * r
        out = h1 + h2

    out = out + b_ref[...]                                       # (1, Dp) broadcasts
    o_ref[...] = out.reshape(bt, tn, dp).astype(o_ref.dtype)


def _round_up(x, m):
    return (x + m - 1) // m * m


def _vmem_estimate(bt, tn, n, d_in, dp, adj_item):
    """VMEM bytes: double-buffered pipeline tiles + in-kernel temporaries."""
    adj_tile = bt * tn * n * adj_item
    x_tile = bt * n * d_in * 4
    out_tile = bt * tn * dp * 4
    wgt = (2 * d_in * dp + dp) * 4
    pipeline = 2 * (adj_tile + x_tile + out_tile + wgt)          # 2x double buffer
    temps = (bt * tn * n * 2            # bf16 adjacency cast
             + bt * n * d_in * 2        # bf16 X cast
             + bt * tn * d_in * 4       # ax
             + bt * tn * 2 * d_in * 4   # [ax | x] concat
             + 2 * bt * tn * dp * 4)    # matmul result + biased output
    return pipeline + temps


def dense_graph_convolution(adjacency, X, w1, w2, bias=None, *,
                            aggregate='sum', batch_block=8, adj_dtype=jnp.int8):
    """adjacency: [B, N, N], X: [B, N, Din] -> [B, N, Dout] (float32).

    adj_dtype=jnp.int8 is exact for binary (0/1) adjacencies and minimizes the
    dominant HBM stream; pass jnp.float32 for weighted adjacencies where exact
    edge weights matter.
    """
    assert aggregate in ('sum', 'max', 'mean'), 'unknown aggregate'
    B, N, N2 = adjacency.shape
    assert N == N2
    Din = X.shape[-1]
    Dout = w1.shape[0]
    if bias is None:
        bias = jnp.zeros((Dout,), jnp.float32)

    # Lane-pad the output feature dim to a multiple of 128 (lane-dense stores).
    Dp = _round_up(Dout, 128)

    # Pre-transpose, stack and zero-pad the two weights once in HBM:
    #   rows [0:Din] = W1^T, rows [Din:2*Din] = W2^T, columns padded to Dp.
    w1t = jnp.pad(w1.T.astype(jnp.float32), ((0, 0), (0, Dp - Dout)))
    w2t = jnp.pad(w2.T.astype(jnp.float32), ((0, 0), (0, Dp - Dout)))
    wcat = jnp.concatenate([w1t, w2t], axis=0)                   # (2*Din, Dp)
    b2d = jnp.pad(bias.astype(jnp.float32), (0, Dp - Dout)).reshape(1, Dp)

    adj = adjacency.astype(adj_dtype)
    adj_item = jnp.dtype(adj_dtype).itemsize
    Xf = X.astype(jnp.float32)

    # Generation-aware VMEM budget (~75% of physical VMEM: ~96 MiB on
    # v5e/v6e's 128 MiB, ~48 MiB on v7x's 64 MiB).
    try:
        info = pltpu.get_tpu_info()
        vmem_cap = int(getattr(info, 'vmem_capacity_bytes', 0)) or (64 << 20)
    except Exception:
        vmem_cap = 64 << 20
    budget = int(0.75 * vmem_cap)

    # Batch tile: largest divisor of B <= batch_block, keeping >= 2 grid steps
    # along the batch axis when possible so v7x's two TensorCores both get work.
    bt = max(1, min(batch_block, B))
    if B >= 2:
        bt = max(1, min(bt, B // 2))
    while B % bt:
        bt -= 1

    # Adjacency row tile: whole N unless that blows the VMEM budget, otherwise
    # shrink in multiples of 32 rows (int8 sublane packing) that divide N.
    row_cands = [N] + sorted((d for d in range(32, N, 32) if N % d == 0),
                             reverse=True)
    tn = row_cands[-1]
    for cand in row_cands:
        if _vmem_estimate(bt, cand, N, Din, Dp, adj_item) <= budget:
            tn = cand
            break
    while bt > 1 and _vmem_estimate(bt, tn, N, Din, Dp, adj_item) > budget:
        bt -= 1
        while B % bt:
            bt -= 1

    est = _vmem_estimate(bt, tn, N, Din, Dp, adj_item)
    vmem_limit = int(min(budget, max(32 << 20, int(est * 1.5))))

    flops = 2 * B * N * N * Din + 2 * B * N * (2 * Din) * Dp
    bytes_accessed = (int(adj.size) * adj_item + int(Xf.size) * 4
                      + int(wcat.size) * 4 + int(b2d.size) * 4
                      + B * N * Dp * 4)

    kernel = functools.partial(_dense_graph_conv_kernel,
                               aggregate=aggregate, d_in=Din, d_out=Dout)

    out = pl.pallas_call(
        kernel,
        out_shape=jax.ShapeDtypeStruct((B, N, Dp), jnp.float32),
        grid_spec=pltpu.PrefetchScalarGridSpec(
            num_scalar_prefetch=0,
            grid=(B // bt, N // tn),
            in_specs=[
                pl.BlockSpec((bt, tn, N),   lambda b, j: (b, j, 0)),
                pl.BlockSpec((bt, N, Din),  lambda b, j: (b, 0, 0)),
                pl.BlockSpec((2 * Din, Dp), lambda b, j: (0, 0)),
                pl.BlockSpec((1, Dp),       lambda b, j: (0, 0)),
            ],
            out_specs=pl.BlockSpec((bt, tn, Dp), lambda b, j: (b, j, 0)),
        ),
        compiler_params=pltpu.CompilerParams(
            dimension_semantics=("parallel", "parallel"),
            vmem_limit_bytes=vmem_limit,
        ),
        cost_estimate=pl.CostEstimate(
            flops=flops, transcendentals=0, bytes_accessed=bytes_accessed),
    )(adj, Xf, wcat, b2d)

    return out[..., :Dout] if Dp != Dout else out


def _reference(adjacency, X, w1, w2, bias, aggregate='sum'):
    h1 = jnp.einsum('bnm,bmd->bnd', adjacency, X) @ w1.T
    if aggregate == 'max':
        h1 = jnp.max(h1, axis=-1, keepdims=True)
    elif aggregate == 'mean':
        h1 = h1 / jnp.sum(h1, axis=-1, keepdims=True)
    return h1 + (X @ w2.T + bias)


if __name__ == "__main__":
    # Small, deterministic problem.
    B, N, D_IN, D_OUT = 4, 16, 32, 64

    key = jax.random.PRNGKey(0)
    k_adj, k_x, k_w1, k_w2, k_b = jax.random.split(key, 5)

    # Binary adjacency (0/1) -> exact in int8/bf16.
    adjacency = (jax.random.uniform(k_adj, (B, N, N)) > 0.5).astype(jnp.float32)
    # Non-negative X / w1 keep the 'mean' normalization (divide by the feature
    # sum) well away from zero, so the bf16-MXU kernel can be compared against
    # the f32 reference without catastrophic amplification near sum==0.
    X = jax.random.uniform(k_x, (B, N, D_IN), dtype=jnp.float32)
    w1 = jax.random.uniform(k_w1, (D_OUT, D_IN), dtype=jnp.float32) * 0.1
    w2 = jax.random.normal(k_w2, (D_OUT, D_IN), dtype=jnp.float32) * 0.1
    bias = jax.random.normal(k_b, (D_OUT,), dtype=jnp.float32) * 0.1

    # bf16 MXU inputs for the (adj @ X) matmul -> compare at bf16-appropriate
    # tolerance against the f32 reference.
    for agg in ('sum', 'max', 'mean'):
        out = dense_graph_convolution(adjacency, X, w1, w2, bias, aggregate=agg)
        out = jax.block_until_ready(out)
        assert out.shape == (B, N, D_OUT)
        ref = _reference(adjacency, X, w1, w2, bias, aggregate=agg)
        assert jnp.allclose(out, ref, atol=2e-2, rtol=5e-2), \
            f"mismatch vs reference (aggregate={agg})"

    print("KERNEL_OK")
</pallas_src>

<mosaic_0001>
module attributes {stable_mosaic.version = 11 : i64} {
  func.func @_dense_graph_conv_kernel(%arg0: i32, %arg1: i32, %arg2: memref<2x16x16xi8, #tpu.memory_space<vmem>>, %arg3: memref<2x16x32xf32, #tpu.memory_space<vmem>>, %arg4: memref<64x128xf32, #tpu.memory_space<vmem>>, %arg5: memref<1x128xf32, #tpu.memory_space<vmem>>, %arg6: memref<2x16x128xf32, #tpu.memory_space<vmem>>) attributes {dimension_semantics = [#tpu.dimension_semantics<parallel>, #tpu.dimension_semantics<parallel>], iteration_bounds = array<i64: 2, 1>, scalar_prefetch = 0 : i64, scratch_operands = 0 : i64, tpu.core_type = #tpu.core_type<tc>, window_params = [{transform_indices = @transform_0, window_bounds = array<i64: 2, 16, 16>}, {transform_indices = @transform_1, window_bounds = array<i64: 2, 16, 32>}, {pipeline_mode = #tpu.pipeline_mode<synchronous>, transform_indices = @transform_2, window_bounds = array<i64: 64, 128>}, {pipeline_mode = #tpu.pipeline_mode<synchronous>, transform_indices = @transform_3, window_bounds = array<i64: 1, 128>}, {transform_indices = @transform_4, window_bounds = array<i64: 2, 16, 128>}]} {
    %c0 = arith.constant 0 : index
    %c0_0 = arith.constant 0 : index
    %c0_1 = arith.constant 0 : index
    %0 = vector.load %arg2[%c0, %c0_0, %c0_1] : memref<2x16x16xi8, #tpu.memory_space<vmem>>, vector<2x16x16xi8>
    %c0_2 = arith.constant 0 : index
    %c0_3 = arith.constant 0 : index
    %c0_4 = arith.constant 0 : index
    %1 = vector.load %arg3[%c0_2, %c0_3, %c0_4] : memref<2x16x32xf32, #tpu.memory_space<vmem>>, vector<2x16x32xf32>
    %2 = arith.sitofp %0 : vector<2x16x16xi8> to vector<2x16x16xbf16>
    %3 = arith.truncf %1 : vector<2x16x32xf32> to vector<2x16x32xbf16>
    "tpu.trace_start"() <{level = 10 : i32, message = "brm,bmd->brd"}> : () -> ()
    %cst = arith.constant dense<0.000000e+00> : vector<2x16x32xf32>
    %4 = tpu.matmul %2, %3, %cst {dimension_numbers = #tpu.dot_dimension_numbers<[2], [1], [1], [2], [0, 0, 0, 1, 1, 2], [0], [0]>} : vector<2x16x16xbf16>, vector<2x16x32xbf16>, vector<2x16x32xf32> -> vector<2x16x32xf32>
    "tpu.trace_stop"() : () -> ()
    %5 = vector.shape_cast %4 : vector<2x16x32xf32> to vector<32x32xf32>
    %6 = vector.shape_cast %1 : vector<2x16x32xf32> to vector<32x32xf32>
    %7 = tpu.concatenate %5, %6 in 1 : vector<32x32xf32>, vector<32x32xf32> -> vector<32x64xf32>
    %c0_5 = arith.constant 0 : index
    %c0_6 = arith.constant 0 : index
    %8 = vector.load %arg4[%c0_5, %c0_6] : memref<64x128xf32, #tpu.memory_space<vmem>>, vector<64x128xf32>
    %cst_7 = arith.constant dense<0.000000e+00> : vector<32x128xf32>
    %9 = tpu.matmul %7, %8, %cst_7 {dimension_numbers = #tpu.dot_dimension_numbers<[1], [0], [0], [1], [0, 0, 1, 1], [], []>} : vector<32x64xf32>, vector<64x128xf32>, vector<32x128xf32> -> vector<32x128xf32>
    %c0_8 = arith.constant 0 : index
    %c0_9 = arith.constant 0 : index
    %10 = vector.load %arg5[%c0_8, %c0_9] : memref<1x128xf32, #tpu.memory_space<vmem>>, vector<1x128xf32>
    %11 = vector.broadcast %10 : vector<1x128xf32> to vector<32x128xf32>
    %12 = arith.addf %9, %11 : vector<32x128xf32>
    %13 = vector.shape_cast %12 : vector<32x128xf32> to vector<2x16x128xf32>
    %c0_10 = arith.constant 0 : index
    %c0_11 = arith.constant 0 : index
    %c0_12 = arith.constant 0 : index
    %14 = vector.load %arg6[%c0_10, %c0_11, %c0_12] : memref<2x16x128xf32, #tpu.memory_space<vmem>>, vector<2x16x128xf32>
    tpu.vector_store %arg6[%c0_10, %c0_11, %c0_12], %13 {strides = array<i32>} : memref<2x16x128xf32, #tpu.memory_space<vmem>>, vector<2x16x128xf32>,
    return
  }
  func.func @transform_0(%arg0: i32, %arg1: i32) -> (i32, i32, i32) {
    %c0_i32 = arith.constant 0 : i32
    %c0_i32_0 = arith.constant 0 : i32
    return %arg0, %arg1, %c0_i32 : i32, i32, i32
  }
  func.func @transform_1(%arg0: i32, %arg1: i32) -> (i32, i32, i32) {
    %c0_i32 = arith.constant 0 : i32
    %c0_i32_0 = arith.constant 0 : i32
    %c0_i32_1 = arith.constant 0 : i32
    return %arg0, %c0_i32, %c0_i32_0 : i32, i32, i32
  }
  func.func @transform_2(%arg0: i32, %arg1: i32) -> (i32, i32) {
    %c0_i32 = arith.constant 0 : i32
    %c0_i32_0 = arith.constant 0 : i32
    %c0_i32_1 = arith.constant 0 : i32
    return %c0_i32, %c0_i32_0 : i32, i32
  }
  func.func @transform_3(%arg0: i32, %arg1: i32) -> (i32, i32) {
    %c0_i32 = arith.constant 0 : i32
    %c0_i32_0 = arith.constant 0 : i32
    %c0_i32_1 = arith.constant 0 : i32
    return %c0_i32, %c0_i32_0 : i32, i32
  }
  func.func @transform_4(%arg0: i32, %arg1: i32) -> (i32, i32, i32) {
    %c0_i32 = arith.constant 0 : i32
    %c0_i32_0 = arith.constant 0 : i32
    return %arg0, %arg1, %c0_i32 : i32, i32, i32
  }
}

</mosaic_0001>

<llo_original>
// kernel: tpu_custom_call.1
$region0: #{tpu_custom_call.1}
  #allocation0 [shape = 'u32[]', space=smem, size = 0x4, offset = 0x4, fixed_abs, tag = 'smem constant byte address 0x4 - core index']
  #allocation1 [shape = 'u32[144,128]{1,0:T(1,128)}', space=vmem, size = 0x12000, scoped, tag = 'internal scratch']
  %s0 = inlined_call_operand.hbm [shape: s8[4,16,16], index: 0, kind: input, shape index: {}]
  %s1 = inlined_call_operand.hbm [shape: f32[4,16,32], index: 1, kind: input, shape index: {}]
  %s2 = inlined_call_operand.hbm [shape: f32[64,128], index: 2, kind: input, shape index: {}]
  %s3 = inlined_call_operand.vmem [shape: f32[1,128], index: 3, kind: input, shape index: {}]
  %s4 = inlined_call_operand.hbm [shape: f32[4,16,128], index: 4, kind: output, shape index: {}]
  %s5 = sld [smem:[#allocation0]]
  $region61: #{tpu_custom_call.1} parent=0
    _
  %s7 = ssub.s32 1, %s5
  %s8 = scalar_select 0, %s7, %s5
  $region1: #{tpu_custom_call.1} parent=0
    #allocation2 [shape = 'u8[8192]{0}', space=vmem, size = 0x2000, scoped, tag = 'input window, operand 0']
    #allocation3 [shape = 's32[2]{0}', space=sflag, size = 0x8, scoped, tag = 'scoped memory for tpu_custom_call.1']
    #allocation4 [shape = 's32[2]{0}', space=sflag, size = 0x8, scoped, tag = 'scoped memory for tpu_custom_call.1']
    #allocation5 [shape = 'u8[32768]{0}', space=vmem, size = 0x8000, scoped, tag = 'input window, operand 1']
    #allocation6 [shape = 's32[2]{0}', space=sflag, size = 0x8, scoped, tag = 'scoped memory for tpu_custom_call.1']
    #allocation7 [shape = 'u8[32768]{0}', space=vmem, size = 0x8000, scoped, tag = 'input window, operand 2, single buffered']
    #allocation8 [shape = 'u8[32768]{0}', space=vmem, size = 0x8000, scoped, tag = 'output window, operand 0']
    %9 = vsyncpa [#allocation3], 0
    %s10 = scalar_lea.sflag [#allocation3], 1
    %11 = vsyncpa %s10, 0
    %12 = vsyncpa [#allocation6], 0
    %s13 = scalar_lea.sflag [#allocation6], 1
    %14 = vsyncpa %s13, 0
    %15 = vsyncpa [#allocation4], 0
    %s16 = scalar_lea.sflag [#allocation4], 1
    %17 = vsyncpa %s16, 0
    loop: start=0, step=1, limit=4
    $region2: #{tpu_custom_call.1} parent=1 // loop_pre_header
      _
    $region3: #{tpu_custom_call.1} parent=1 // loop_header
      %s19 = sphi 0, %s23
      %p20 = scmp.ge.s32.totalorder %s19, 4
      %s26 = sphi 0, %s38
      %s27 = sphi 0, %s34
      %s28 = sphi 0, %s26
      %s29 = sphi 0, %s27
      %s30 = sphi 0, %s28
      %s31 = sphi 0, %s29
      %s43 = sphi 0, %s45
      %s46 = sphi 0, %s43
      %s47 = sphi 0, %s46
      %s63 = sphi 0, %s47
      %s69 = sphi 0, %s71
      %s72 = sphi 0, %s69
      %s73 = sphi 0, %s72
      %s89 = sphi 0, %s73
      %s93 = sphi 0, %s93
      %s95 = sphi 0, %s93
      %s96 = sphi 0, %s95
      %s110 = sphi 0, %s96
      %s114 = sphi 0, %s114
      %s116 = sphi 0, %s114
      %s117 = sphi 0, %s116
      %s131 = sphi 0, %s117
      %s139 = sphi 0, %s141
      %s142 = sphi 0, %s139
      %s143 = sphi 0, %s142
      %s159 = sphi 0, %s143
    $region4: #{tpu_custom_call.1} parent=1 // loop_header_branch
      %22 = sbr.rel (%p20) target = $region8
    $region5: #{tpu_custom_call.1} parent=1 // loop_body
      %s24 = ssub.s32 %s19, 1
      %s25 = ssub.s32 %s19, 2
      %s32 = sadd.s32 1, %s27
      %p33 = scmp.ge.s32.totalorder %s32, 1
      %s34 = scalar_select %p33, 0, %s32
      %s35 = sadd.s32 1, %s26
      %s36 = scalar_select %p33, %s35, %s26
      %p37 = scmp.ge.s32.totalorder %s36, 2
      %s38 = scalar_select %p37, 0, %s36
      %s39 = ssub.s32 %s26, %s38
      %s40 = ssub.s32 %s27, %s34
      %s41 = sor.u32 %s39, %s40
      %p42 = scmp.eq.s32.totalorder %s41, 0
      %s44 = sadd.s32 %s43, 1
      %s45 = scalar_select %p42, %s43, %s44
      %p48 = pneg %p42
      %p49 = scmp.eq.s32.totalorder %s19, 1
      %p50 = por %p48, %p49
      %p51 = scmp.ne.s32.totalorder %s43, %s46
      %p52 = scmp.eq.s32.totalorder %s19, 0
      %p53 = por %p51, %p52
      %p54 = scmp.ne.s32.totalorder %s43, %s46
      %p55 = scmp.eq.s32.totalorder %s24, 1
      %p56 = por %p54, %p55
      %p57 = scmp.ne.s32.totalorder %s46, %s47
      %p58 = scmp.eq.s32.totalorder %s24, 0
      %p59 = por %p57, %p58
      %p60 = scmp.ne.s32.totalorder %s46, %s47
      %p61 = scmp.eq.s32.totalorder %s25, 1
      %p62 = por %p60, %p61
      %p64 = scmp.ne.s32.totalorder %s47, %s63
      %p65 = scmp.eq.s32.totalorder %s25, 0
      %p66 = por %p64, %p65
      %s67 = ssub.s32 %s26, %s38
      %p68 = scmp.eq.s32.totalorder %s67, 0
      %s70 = sadd.s32 %s69, 1
      %s71 = scalar_select %p68, %s69, %s70
      %p74 = pneg %p68
      %p75 = scmp.eq.s32.totalorder %s19, 1
      %p76 = por %p74, %p75
      %p77 = scmp.ne.s32.totalorder %s69, %s72
      %p78 = scmp.eq.s32.totalorder %s19, 0
      %p79 = por %p77, %p78
      %p80 = scmp.ne.s32.totalorder %s69, %s72
      %p81 = scmp.eq.s32.totalorder %s24, 1
      %p82 = por %p80, %p81
      %p83 = scmp.ne.s32.totalorder %s72, %s73
      %p84 = scmp.eq.s32.totalorder %s24, 0
      %p85 = por %p83, %p84
      %p86 = scmp.ne.s32.totalorder %s72, %s73
      %p87 = scmp.eq.s32.totalorder %s25, 1
      %p88 = por %p86, %p87
      %p90 = scmp.ne.s32.totalorder %s73, %s89
      %p91 = scmp.eq.s32.totalorder %s25, 0
      %p92 = por %p90, %p91
      %s94 = sadd.s32 %s93, 1
      %p97 = scmp.eq.s32.totalorder %s19, 1
      %p98 = scmp.ne.s32.totalorder %s93, %s95
      %p99 = scmp.eq.s32.totalorder %s19, 0
      %p100 = por %p98, %p99
      %p101 = scmp.ne.s32.totalorder %s93, %s95
      %p102 = scmp.eq.s32.totalorder %s24, 1
      %p103 = por %p101, %p102
      %p104 = scmp.ne.s32.totalorder %s95, %s96
      %p105 = scmp.eq.s32.totalorder %s24, 0
      %p106 = por %p104, %p105
      %p107 = scmp.ne.s32.totalorder %s95, %s96
      %p108 = scmp.eq.s32.totalorder %s25, 1
      %p109 = por %p107, %p108
      %p111 = scmp.ne.s32.totalorder %s96, %s110
      %p112 = scmp.eq.s32.totalorder %s25, 0
      %p113 = por %p111, %p112
      %s115 = sadd.s32 %s114, 1
      %p118 = scmp.eq.s32.totalorder %s19, 1
      %p119 = scmp.ne.s32.totalorder %s114, %s116
      %p120 = scmp.eq.s32.totalorder %s19, 0
      %p121 = por %p119, %p120
      %p122 = scmp.ne.s32.totalorder %s114, %s116
      %p123 = scmp.eq.s32.totalorder %s24, 1
      %p124 = por %p122, %p123
      %p125 = scmp.ne.s32.totalorder %s116, %s117
      %p126 = scmp.eq.s32.totalorder %s24, 0
      %p127 = por %p125, %p126
      %p128 = scmp.ne.s32.totalorder %s116, %s117
      %p129 = scmp.eq.s32.totalorder %s25, 1
      %p130 = por %p128, %p129
      %p132 = scmp.ne.s32.totalorder %s117, %s131
      %p133 = scmp.eq.s32.totalorder %s25, 0
      %p134 = por %p132, %p133
      %s135 = ssub.s32 %s26, %s38
      %s136 = ssub.s32 %s27, %s34
      %s137 = sor.u32 %s135, %s136
      %p138 = scmp.eq.s32.totalorder %s137, 0
      %s140 = sadd.s32 %s139, 1
      %s141 = scalar_select %p138, %s139, %s140
      %p144 = pneg %p138
      %p145 = scmp.eq.s32.totalorder %s19, 1
      %p146 = por %p144, %p145
      %p147 = scmp.ne.s32.totalorder %s139, %s142
      %p148 = scmp.eq.s32.totalorder %s19, 0
      %p149 = por %p147, %p148
      %p150 = scmp.ne.s32.totalorder %s139, %s142
      %p151 = scmp.eq.s32.totalorder %s24, 1
      %p152 = por %p150, %p151
      %p153 = scmp.ne.s32.totalorder %s142, %s143
      %p154 = scmp.eq.s32.totalorder %s24, 0
      %p155 = por %p153, %p154
      %p156 = scmp.ne.s32.totalorder %s142, %s143
      %p157 = scmp.eq.s32.totalorder %s25, 1
      %p158 = por %p156, %p157
      %p160 = scmp.ne.s32.totalorder %s143, %s159
      %p161 = scmp.eq.s32.totalorder %s25, 0
      %p162 = por %p160, %p161
      %p163 = scmp.le.s32.totalorder 1, %s19
      %p164 = scmp.lt.s32.totalorder %s19, 3
      %p165 = pnand %p163, %p164
      %p166 = pneg %p165
      // Predicated region
      $region9: #{tpu_custom_call.1} parent=5 // pred_check
        _
      $region10: #{tpu_custom_call.1} parent=5 // pred_check_branch
        %168 = sbr.rel (%p165) target = $region12
      $region11: #{tpu_custom_call.1} parent=5 // pred_region
        %s169 = ssub.s32 %s19, 1
        // Predicated region
        $region13: #{tpu_custom_call.1} parent=11 // pred_check
          %p170 = pneg %p106
        $region14: #{tpu_custom_call.1} parent=11 // pred_check_branch
          %172 = sbr.rel (%p170) target = $region16
        $region15: #{tpu_custom_call.1} parent=11 // pred_region
          %s174 = ssub.s32 1024, 1024
          %175 = vsyncadd [#allocation6], %s174
          %s176 = sshll.u32 [#allocation7], 4
          %s177 = int_to_ptr.vmem [resolvable:$true] %s176
          %182 = dma.hbm_to_vmem [thread:$0]  %s2, 1024, %s177, [#allocation6], 128, 128, 8
        $region16: #{tpu_custom_call.1} parent=11 // pred_fallthru
          _
        // Predicated region
        $region17: #{tpu_custom_call.1} parent=11 // pred_check
          %p183 = pneg %p127
        $region18: #{tpu_custom_call.1} parent=11 // pred_check_branch
          %185 = sbr.rel (%p183) target = $region20
        $region19: #{tpu_custom_call.1} parent=11 // pred_region
          _
        $region20: #{tpu_custom_call.1} parent=11 // pred_fallthru
          _
      $region12: #{tpu_custom_call.1} parent=5 // pred_fallthru
        _
      %p186 = scmp.lt.s32.totalorder %s19, 2
      // Predicated region
      $region21: #{tpu_custom_call.1} parent=5 // pred_check
        %p187 = pneg %p186
      $region22: #{tpu_custom_call.1} parent=5 // pred_check_branch
        %189 = sbr.rel (%p187) target = $region24
      $region23: #{tpu_custom_call.1} parent=5 // pred_region
        // Predicated region
        $region25: #{tpu_custom_call.1} parent=23 // pred_check
          %p190 = pneg %p53
        $region26: #{tpu_custom_call.1} parent=23 // pred_check_branch
          %192 = sbr.rel (%p190) target = $region28
        $region27: #{tpu_custom_call.1} parent=23 // pred_region
          %s193 = sand.u32 %s43, 1
          %s194 = scalar_lea.sflag [#allocation3], %s193
          %s195 = sand.u32 %s43, 1
          %s196 = smul.addr %s195, 8
          %s197 = scalar_lea.vmem [#allocation2], %s196
          %s198 = smul.u32 2, %s26
          %s199 = smul.u32 2, %s27
          %s201 = ssub.s32 128, 128
          %202 = vsyncadd %s194, %s201
          %s203 = smul.addr %s198, 2
          %s204 = sadd.s32 %s199, %s203
          %s205 = smul.addr %s204, 32
          %s206 = scalar_lea.hbm %s0, %s205
          %s207 = sshll.u32 %s197, 4
          %s208 = int_to_ptr.vmem [resolvable:$true] %s207
          %213 = dma.hbm_to_vmem [thread:$0]  %s206, 128, %s208, %s194, 32, 32, 2
        $region28: #{tpu_custom_call.1} parent=23 // pred_fallthru
          _
        // Predicated region
        $region29: #{tpu_custom_call.1} parent=23 // pred_check
          %p214 = pneg %p79
        $region30: #{tpu_custom_call.1} parent=23 // pred_check_branch
          %216 = sbr.rel (%p214) target = $region32
        $region31: #{tpu_custom_call.1} parent=23 // pred_region
          %s217 = sand.u32 %s19, 1
          %s218 = scalar_lea.sflag [#allocation6], %s217
          %s219 = sand.u32 %s69, 1
          %s220 = smul.addr %s219, 32
          %s221 = scalar_lea.vmem [#allocation5], %s220
          %s222 = smul.u32 2, %s26
          %s224 = ssub.s32 512, 512
          %225 = vsyncadd %s218, %s224
          %s226 = smul.addr %s222, 2
          %s227 = smul.addr %s226, 128
          %s228 = scalar_lea.hbm %s1, %s227
          %s229 = sshll.u32 %s221, 4
          %s230 = int_to_ptr.vmem [resolvable:$true] %s229
          %235 = dma.hbm_to_vmem [thread:$0]  %s228, 512, %s230, %s218, 128, 128, 8
        $region32: #{tpu_custom_call.1} parent=23 // pred_fallthru
          _
      $region24: #{tpu_custom_call.1} parent=5 // pred_fallthru
        _
      %p236 = scmp.le.s32.totalorder 1, %s19
      %p237 = scmp.lt.s32.totalorder %s19, 3
      %p238 = pnand %p236, %p237
      %p239 = pneg %p238
      // Predicated region
      $region33: #{tpu_custom_call.1} parent=5 // pred_check
        _
      $region34: #{tpu_custom_call.1} parent=5 // pred_check_branch
        %241 = sbr.rel (%p238) target = $region36
      $region35: #{tpu_custom_call.1} parent=5 // pred_region
        %s242 = ssub.s32 %s19, 1
        %s243 = sand.u32 %s46, 1
        %s244 = scalar_lea.sflag [#allocation3], %s243
        %s245 = sand.u32 %s46, 1
        %s246 = smul.addr %s245, 8
        %s247 = scalar_lea.vmem [#allocation2], %s246
        // Predicated region
        $region37: #{tpu_custom_call.1} parent=35 // pred_check
          %p248 = pneg %p59
        $region38: #{tpu_custom_call.1} parent=35 // pred_check_branch
          %250 = sbr.rel (%p248) target = $region40
        $region39: #{tpu_custom_call.1} parent=35 // pred_region
          %251 = dma.done %s244, 128
        $region40: #{tpu_custom_call.1} parent=35 // pred_fallthru
          _
        %s252 = sand.u32 %s24, 1
        %s253 = scalar_lea.sflag [#allocation6], %s252
        %s254 = sand.u32 %s72, 1
        %s255 = smul.addr %s254, 32
        %s256 = scalar_lea.vmem [#allocation5], %s255
        // Predicated region
        $region41: #{tpu_custom_call.1} parent=35 // pred_check
          %p257 = pneg %p85
        $region42: #{tpu_custom_call.1} parent=35 // pred_check_branch
          %259 = sbr.rel (%p257) target = $region44
        $region43: #{tpu_custom_call.1} parent=35 // pred_region
          %260 = dma.done %s253, 512
        $region44: #{tpu_custom_call.1} parent=35 // pred_fallthru
          _
        // Predicated region
        $region45: #{tpu_custom_call.1} parent=35 // pred_check
          %p261 = pneg %p106
        $region46: #{tpu_custom_call.1} parent=35 // pred_check_branch
          %263 = sbr.rel (%p261) target = $region48
        $region47: #{tpu_custom_call.1} parent=35 // pred_region
          %264 = dma.done [#allocation6], 1024
        $region48: #{tpu_custom_call.1} parent=35 // pred_fallthru
          _
        %s265 = sand.u32 %s46, 1
        %s266 = scalar_lea.sflag [#allocation3], %s265
        %s267 = sand.u32 %s46, 1
        %s268 = smul.addr %s267, 8
        %s269 = scalar_lea.vmem [#allocation2], %s268
        %p270 = pneg %p59
        %p271 = pneg %p56
        %s272 = sand.u32 %s24, 1
        %s273 = scalar_lea.sflag [#allocation6], %s272
        %s274 = sand.u32 %s72, 1
        %s275 = smul.addr %s274, 32
        %s276 = scalar_lea.vmem [#allocation5], %s275
        %p277 = pneg %p85
        %p278 = pneg %p82
        %p279 = pneg %p106
        %p280 = pneg %p103
        %p281 = pneg %p127
        %p282 = pneg %p124
        %p283 = pneg %p155
        %p284 = pneg %p152
        %s285 = sand.u32 %s142, 1
        %s286 = scalar_lea.sflag [#allocation4], %s285
        %s287 = sand.u32 %s142, 1
        %s288 = smul.addr %s287, 32
        %s289 = scalar_lea.vmem [#allocation8], %s288
        %s290 = smul.u32 2, %s28
        %s291 = smul.u32 2, %s29
        %s292 = smul.u32 2, %s28
        %s293 = smul.u32 2, %s28
        %s294 = smul.u32 2, %s29
        %v296 = vld [vmem:[%s247] sm:$0x3]
        %v297 = vld [vmem:[%s247 + $0x2] sm:$0x3]
        %v298 = vld [vmem:[%s247 + $0x4] sm:$0x3]
        %v299 = vld [vmem:[%s247 + $0x6] sm:$0x3]
        %v300 = vld [vmem:[%s256] sm:$0xff]
        %v301 = vld [vmem:[%s256 + $0x8] sm:$0xff]
        %v302 = vld [vmem:[%s256 + $0x10] sm:$0xff]
        %v303 = vld [vmem:[%s256 + $0x18] sm:$0xff]
        %v304 = vunpack.c.l.s8.bf16 %v296
        %v305 = vunpack.c.l.s8.bf16 %v297
        %v306 = vunpack.c.l.s8.bf16 %v298
        %v307 = vunpack.c.l.s8.bf16 %v299
        %v308 = vpack.c.bf16 %v301, %v300
        %v309 = vpack.c.bf16 %v303, %v302
        %v312 = vunpack.c.l.b16 %v304
        %v313 = vunpack.c.l.b16 %v305
        %v314 = vpack.c.b16 %v313, %v312
        %vm315 = vcmask 130048
        %v317 = vsel %vm315, %v314, 0
        %319 = vmatprep.subr.bf16.mxu0 0
        %320 = vmatpush1.bf16.msra.mxu0 %v308
        %321 = vmatprep.subr.bf16.mxu0 0
        %322 = vmatpush1.bf16.msra.mxu0 0
        %323 = vmatprep.subr.bf16.mxu0 0
        %324 = vmatpush1.bf16.msra.mxu0 0
        %325 = vmatprep.subr.bf16.mxu0 0
        %326 = vmatpush1.bf16.msra.mxu0 0
        %327 = vmatprep.subr.bf16.mxu0 0
        %328 = vmatpush1.bf16.msra.mxu0 0
        %329 = vmatprep.subr.bf16.mxu0 0
        %330 = vmatpush1.bf16.msra.mxu0 0
        %331 = vmatprep.subr.bf16.mxu0 0
        %332 = vmatpush1.bf16.msra.mxu0 0
        %333 = vmatprep.subr.bf16.mxu0 0
        %334 = vmatpush1.bf16.msra.mxu0 0
        %335 = vmatprep.subr.bf16.mxu0 0
        %336 = vmatpush1.bf16.msra.mxu0 0
        %337 = vmatprep.subr.bf16.mxu0 0
        %338 = vmatpush1.bf16.msra.mxu0 0
        %339 = vmatprep.subr.bf16.mxu0 0
        %340 = vmatpush1.bf16.msra.mxu0 0
        %341 = vmatprep.subr.bf16.mxu0 0
        %342 = vmatpush1.bf16.msra.mxu0 0
        %343 = vmatprep.subr.bf16.mxu0 0
        %344 = vmatpush1.bf16.msra.mxu0 0
        %345 = vmatprep.subr.bf16.mxu0 0
        %346 = vmatpush1.bf16.msra.mxu0 0
        %347 = vmatprep.subr.bf16.mxu0 0
        %348 = vmatpush1.bf16.msra.mxu0 0
        %349 = vmatprep.subr.bf16.mxu0 0
        %350 = vmatpush1.bf16.msra.mxu0 0
        %351 = vmatprep.mubr.bf16.mxu0 0
        %352 = vmatmul.mubr.bf16.gmra.mrb[0].mxu0 %v317
        %v353 = vpop.f32.mrb[0].mxu0
        %v354 = vadd.f32 0.0, %v353
        %v355 = vpop.f32.mrb[0].mxu0
        %v356 = vpop.f32.mrb[0].mxu0
        %v357 = vadd.f32 0.0, %v356
        %v358 = vpop.f32.mrb[0].mxu0
        %359 = vdwg.mxu0
        %v362 = vunpack.c.l.b16 %v306
        %v363 = vunpack.c.l.b16 %v307
        %v364 = vpack.c.b16 %v363, %v362
        %v366 = vsel %vm315, %v364, 0
        %368 = vmatprep.subr.bf16.mxu0 0
        %369 = vmatpush1.bf16.msra.mxu0 %v309
        %370 = vmatprep.subr.bf16.mxu0 0
        %371 = vmatpush1.bf16.msra.mxu0 0
        %372 = vmatprep.subr.bf16.mxu0 0
        %373 = vmatpush1.bf16.msra.mxu0 0
        %374 = vmatprep.subr.bf16.mxu0 0
        %375 = vmatpush1.bf16.msra.mxu0 0
        %376 = vmatprep.subr.bf16.mxu0 0
        %377 = vmatpush1.bf16.msra.mxu0 0
        %378 = vmatprep.subr.bf16.mxu0 0
        %379 = vmatpush1.bf16.msra.mxu0 0
        %380 = vmatprep.subr.bf16.mxu0 0
        %381 = vmatpush1.bf16.msra.mxu0 0
        %382 = vmatprep.subr.bf16.mxu0 0
        %383 = vmatpush1.bf16.msra.mxu0 0
        %384 = vmatprep.subr.bf16.mxu0 0
        %385 = vmatpush1.bf16.msra.mxu0 0
        %386 = vmatprep.subr.bf16.mxu0 0
        %387 = vmatpush1.bf16.msra.mxu0 0
        %388 = vmatprep.subr.bf16.mxu0 0
        %389 = vmatpush1.bf16.msra.mxu0 0
        %390 = vmatprep.subr.bf16.mxu0 0
        %391 = vmatpush1.bf16.msra.mxu0 0
        %392 = vmatprep.subr.bf16.mxu0 0
        %393 = vmatpush1.bf16.msra.mxu0 0
        %394 = vmatprep.subr.bf16.mxu0 0
        %395 = vmatpush1.bf16.msra.mxu0 0
        %396 = vmatprep.subr.bf16.mxu0 0
        %397 = vmatpush1.bf16.msra.mxu0 0
        %398 = vmatprep.subr.bf16.mxu0 0
        %399 = vmatpush1.bf16.msra.mxu0 0
        %400 = vmatprep.mubr.bf16.mxu0 0
        %401 = vmatmul.mubr.bf16.gmra.mrb[0].mxu0 %v366
        %v402 = vpop.f32.mrb[0].mxu0
        %v403 = vadd.f32 0.0, %v402
        %v404 = vpop.f32.mrb[0].mxu0
        %v405 = vpop.f32.mrb[0].mxu0
        %v406 = vadd.f32 0.0, %v405
        %v407 = vpop.f32.mrb[0].mxu0
        %408 = vdwg.mxu0
        %413 = vrot.lane.b32.xlu0 %v300, 32
        %v414 = vpop.permute.xlu0 %413
        %415 = vrot.lane.b32.xlu0 %v301, 32
        %v416 = vpop.permute.xlu0 %415
        %417 = vrot.lane.b32.xlu0 %v302, 32
        %v418 = vpop.permute.xlu0 %417
        %419 = vrot.lane.b32.xlu0 %v303, 32
        %v420 = vpop.permute.xlu0 %419
        %vm425 = vcmask 261120
        %v426 = vsel %vm425, %v354, %v414
        %v427 = vsel %vm425, %v357, %v416
        %v428 = vsel %vm425, %v403, %v418
        %v429 = vsel %vm425, %v406, %v420
        %v430 = vld [vmem:[#allocation7] sm:$0xff]
        %v431 = vld [vmem:[#allocation7 + $0x8] sm:$0xff]
        %v432 = vld [vmem:[#allocation7 + $0x10] sm:$0xff]
        %v433 = vld [vmem:[#allocation7 + $0x18] sm:$0xff]
        %v434 = vld [vmem:[#allocation7 + $0x20] sm:$0xff]
        %v435 = vld [vmem:[#allocation7 + $0x28] sm:$0xff]
        %v436 = vld [vmem:[#allocation7 + $0x30] sm:$0xff]
        %v437 = vld [vmem:[#allocation7 + $0x38] sm:$0xff]
        %v438 = vld [vmem:[%s3] sm:$0x1]
        %v440 = vlaneseq
        %v441 = vshrl.u32 %v440, 7
        %v442 = vsub.s32 0, %v441
        %v443 = vrot.slane %v438, %v442
        %vm445 = vcmask 523264
        %v447 = vsel %vm445, %v426, 0
        %v450 = vsel %vm445, %v427, 0
        %v453 = vsel %vm445, %v428, 0
        %v456 = vsel %vm445, %v429, 0
        %458 = vmatprep.subr.mxu0 0.0
        %459 = vmatpush1.msra.mxu0 %v430
        %460 = vmatprep.subr.mxu0 0.0
        %461 = vmatpush1.msra.mxu0 %v431
        %462 = vmatprep.subr.mxu0 0.0
        %463 = vmatpush1.msra.mxu0 %v432
        %464 = vmatprep.subr.mxu0 0.0
        %465 = vmatpush1.msra.mxu0 %v433
        %466 = vmatprep.subr.mxu0 0.0
        %467 = vmatpush1.msra.mxu0 %v434
        %468 = vmatprep.subr.mxu0 0.0
        %469 = vmatpush1.msra.mxu0 %v435
        %470 = vmatprep.subr.mxu0 0.0
        %471 = vmatpush1.msra.mxu0 %v436
        %472 = vmatprep.subr.mxu0 0.0
        %473 = vmatpush1.msra.mxu0 %v437
        %474 = vmatprep.subr.mxu0 0.0
        %475 = vmatpush1.msra.mxu0 0.0
        %476 = vmatprep.subr.mxu0 0.0
        %477 = vmatpush1.msra.mxu0 0.0
        %478 = vmatprep.subr.mxu0 0.0
        %479 = vmatpush1.msra.mxu0 0.0
        %480 = vmatprep.subr.mxu0 0.0
        %481 = vmatpush1.msra.mxu0 0.0
        %482 = vmatprep.subr.mxu0 0.0
        %483 = vmatpush1.msra.mxu0 0.0
        %484 = vmatprep.subr.mxu0 0.0
        %485 = vmatpush1.msra.mxu0 0.0
        %486 = vmatprep.subr.mxu0 0.0
        %487 = vmatpush1.msra.mxu0 0.0
        %488 = vmatprep.subr.mxu0 0.0
        %489 = vmatpush1.msra.mxu0 0.0
        %490 = vmatprep.subr.mxu0 0.0
        %491 = vmatpush1.msra.mxu0 0.0
        %492 = vmatprep.subr.mxu0 0.0
        %493 = vmatpush1.msra.mxu0 0.0
        %494 = vmatprep.subr.mxu0 0.0
        %495 = vmatpush1.msra.mxu0 0.0
        %496 = vmatprep.subr.mxu0 0.0
        %497 = vmatpush1.msra.mxu0 0.0
        %498 = vmatprep.subr.mxu0 0.0
        %499 = vmatpush1.msra.mxu0 0.0
        %500 = vmatprep.subr.mxu0 0.0
        %501 = vmatpush1.msra.mxu0 0.0
        %502 = vmatprep.subr.mxu0 0.0
        %503 = vmatpush1.msra.mxu0 0.0
        %504 = vmatprep.subr.mxu0 0.0
        %505 = vmatpush1.msra.mxu0 0.0
        %506 = vmatprep.subr.mxu0 0.0
        %507 = vmatpush1.msra.mxu0 0.0
        %508 = vmatprep.subr.mxu0 0.0
        %509 = vmatpush1.msra.mxu0 0.0
        %510 = vmatprep.subr.mxu0 0.0
        %511 = vmatpush1.msra.mxu0 0.0
        %512 = vmatprep.subr.mxu0 0.0
        %513 = vmatpush1.msra.mxu0 0.0
        %514 = vmatprep.subr.mxu0 0.0
        %515 = vmatpush1.msra.mxu0 0.0
        %516 = vmatprep.subr.mxu0 0.0
        %517 = vmatpush1.msra.mxu0 0.0
        %518 = vmatprep.subr.mxu0 0.0
        %519 = vmatpush1.msra.mxu0 0.0
        %520 = vmatprep.subr.mxu0 0.0
        %521 = vmatpush1.msra.mxu0 0.0
        %522 = vmatprep.mubr.f32.mxu0 0.0
        %523 = vmatmul.mubr.f32.gmra.mrb[0].mxu0 %v447
        %v524 = vpop.f32.mrb[0].mxu0
        %v525 = vadd.f32 %v443, %v524
        %v526 = vpop.f32.mrb[0].mxu0
        %527 = vmatprep.mubr.f32.mxu0 0.0
        %528 = vmatmul.mubr.f32.gmra.mrb[0].mxu0 %v450
        %v529 = vpop.f32.mrb[0].mxu0
        %v530 = vadd.f32 %v443, %v529
        %v531 = vpop.f32.mrb[0].mxu0
        %532 = vmatprep.mubr.f32.mxu0 0.0
        %533 = vmatmul.mubr.f32.gmra.mrb[0].mxu0 %v453
        %v534 = vpop.f32.mrb[0].mxu0
        %v535 = vadd.f32 %v443, %v534
        %v536 = vpop.f32.mrb[0].mxu0
        %537 = vmatprep.mubr.f32.mxu0 0.0
        %538 = vmatmul.mubr.f32.gmra.mrb[0].mxu0 %v456
        %v539 = vpop.f32.mrb[0].mxu0
        %v540 = vadd.f32 %v443, %v539
        %v541 = vpop.f32.mrb[0].mxu0
        %542 = vdwg.mxu0
        %543 = vst [vmem:[%s289] sm:$0xff] %v525
        %544 = vst [vmem:[%s289 + $0x8] sm:$0xff] %v530
        %545 = vst [vmem:[%s289 + $0x10] sm:$0xff] %v535
        %546 = vst [vmem:[%s289 + $0x18] sm:$0xff] %v540
        %s547 = sand.u32 %s142, 1
        %s548 = scalar_lea.sflag [#allocation4], %s547
        %s549 = sand.u32 %s142, 1
        %s550 = smul.addr %s549, 32
        %s551 = scalar_lea.vmem [#allocation8], %s550
        // Predicated region
        $region49: #{tpu_custom_call.1} parent=35 // pred_check
          %p552 = pneg %p152
        $region50: #{tpu_custom_call.1} parent=35 // pred_check_branch
          %554 = sbr.rel (%p552) target = $region52
        $region51: #{tpu_custom_call.1} parent=35 // pred_region
          %s555 = smul.u32 2, %s28
          %s556 = smul.u32 2, %s29
          %s558 = ssub.s32 512, 512
          %559 = vsyncadd %s548, %s558
          %s560 = smul.addr %s555, 2
          %s561 = sadd.s32 %s556, %s560
          %s562 = smul.addr %s561, 128
          %s563 = scalar_lea.hbm %s4, %s562
          %s564 = sshll.u32 %s551, 4
          %s565 = int_to_ptr.vmem [resolvable:$true] %s564
          %570 = dma.vmem_to_hbm [thread:$0]  %s565, 512, %s563, %s548, 128, 128, 8
        $region52: #{tpu_custom_call.1} parent=35 // pred_fallthru
          _
      $region36: #{tpu_custom_call.1} parent=5 // pred_fallthru
        _
      %p571 = scmp.le.s32.totalorder 2, %s19
      // Predicated region
      $region53: #{tpu_custom_call.1} parent=5 // pred_check
        %p572 = pneg %p571
      $region54: #{tpu_custom_call.1} parent=5 // pred_check_branch
        %574 = sbr.rel (%p572) target = $region56
      $region55: #{tpu_custom_call.1} parent=5 // pred_region
        %s575 = ssub.s32 %s19, 2
        // Predicated region
        $region57: #{tpu_custom_call.1} parent=55 // pred_check
          %p576 = pneg %p158
        $region58: #{tpu_custom_call.1} parent=55 // pred_check_branch
          %578 = sbr.rel (%p576) target = $region60
        $region59: #{tpu_custom_call.1} parent=55 // pred_region
          %s579 = sand.u32 %s143, 1
          %s580 = scalar_lea.sflag [#allocation4], %s579
          %s581 = sand.u32 %s143, 1
          %s582 = smul.addr %s581, 32
          %s583 = scalar_lea.vmem [#allocation8], %s582
          %584 = dma.done %s580, 512
        $region60: #{tpu_custom_call.1} parent=55 // pred_fallthru
          _
      $region56: #{tpu_custom_call.1} parent=5 // pred_fallthru
        _
    $region6: #{tpu_custom_call.1} parent=1 // loop_footer
      %s23 = sadd.s32 1, %s19
    $region7: #{tpu_custom_call.1} parent=1 // loop_footer_branch
      %18 = sbr.rel target = $region3
    $region8: #{tpu_custom_call.1} parent=1 // loop_exit
      _
    %585 = vsyncpa [#allocation3], 1
    %s586 = scalar_lea.sflag [#allocation3], 1
    %587 = vsyncpa %s586, 1
    %588 = vsyncpa [#allocation6], 1
    %s589 = scalar_lea.sflag [#allocation6], 1
    %590 = vsyncpa %s589, 1
    %591 = vsyncpa [#allocation4], 1
    %s592 = scalar_lea.sflag [#allocation4], 1
    %593 = vsyncpa %s592, 1

</llo_original>
